<compile_context>
chip_gen: v6e
topology: v6e:2x2x1
jax: 0.10.0
libtpu: 0.0.40
codegen_flags: <defaults>
</compile_context>

<pallas_src>
import jax
import jax.numpy as jnp
from jax.experimental import pallas as pl
from jax.experimental.pallas import tpu as pltpu

_LANE = 128
_MULTI_CHUNK_BYTES = 1 << 20  # >= 1 MiB: split copy across grid steps / chunks


def _choose_view(n: int) -> tuple[int, int]:
    """Pick a (rows, lane) 2-D view of the flat element count.

    Prefers a sublane-dense view (rows >= 8) with lane a multiple of 128.
    Ragged counts (n % 128 != 0) fall back to a (1, n) view — safe here
    because the copy is pure HBM->HBM DMA (no VMEM block is materialized).
    """
    if n % _LANE != 0:
        return 1, n
    lane = _LANE
    for cand in (1024, 512, 256, 128):
        if n % cand == 0 and n // cand >= 8:
            lane = cand
            break
    return n // lane, lane


def _make_copy_kernel(rows: int, chunk_rows: int, chunks_per_step: int, rem: int):
    """Identity (empty layer list) as a chunked HBM->HBM DMA copy.

    TODO(synk): subclass-specific layers (net_init is abstract in the base
    class) would replace this pass-through with VMEM-tiled layer compute.
    """

    def kernel(x_hbm, o_hbm, sems):
        step = pl.program_id(0)
        copies = []
        # Issue all chunk DMAs for this grid step before waiting (outstanding
        # DMAs hide per-DMA setup latency).
        for c in range(chunks_per_step):
            start = (step * chunks_per_step + c) * chunk_rows
            cp = pltpu.make_async_copy(
                x_hbm.at[pl.ds(start, chunk_rows), :],
                o_hbm.at[pl.ds(start, chunk_rows), :],
                sems.at[c],
            )
            cp.start()
            copies.append(cp)

        if rem:
            # Static-size tail for rows that don't divide evenly into chunks;
            # handled once, by the last grid step.
            @pl.when(step == pl.num_programs(0) - 1)
            def _tail():
                tail = pltpu.make_async_copy(
                    x_hbm.at[pl.ds(rows - rem, rem), :],
                    o_hbm.at[pl.ds(rows - rem, rem), :],
                    sems.at[chunks_per_step],
                )
                tail.start()
                tail.wait()

        for cp in copies:
            cp.wait()

    return kernel


def _identity_copy_pallas(x: jax.Array) -> jax.Array:
    """Materialize a fresh copy of x via a chunked HBM->HBM DMA Pallas kernel."""
    orig_shape = x.shape
    n = x.size
    if n == 0:
        return x

    itemsize = jnp.dtype(x.dtype).itemsize
    rows, lane = _choose_view(n)
    total_bytes = n * itemsize

    # Grid / chunk layout:
    #   * >= 1 MiB: 2 "parallel" grid steps (v7x: one per TensorCore), each
    #     issuing 2 outstanding chunk DMAs when there are enough rows.
    #   * small or single-row (ragged) tensors: one full-ref DMA.
    if rows >= 4 and total_bytes >= _MULTI_CHUNK_BYTES:
        grid_steps, chunks_per_step = 2, 2
    elif rows >= 2 and total_bytes >= _MULTI_CHUNK_BYTES:
        grid_steps, chunks_per_step = 2, 1
    else:
        grid_steps, chunks_per_step = 1, 1
    total_chunks = grid_steps * chunks_per_step
    chunk_rows = rows // total_chunks
    rem = rows - chunk_rows * total_chunks

    x2d = x.reshape(rows, lane)  # layout plumbing only; contiguous, no copy
    out2d = pl.pallas_call(
        _make_copy_kernel(rows, chunk_rows, chunks_per_step, rem),
        out_shape=jax.ShapeDtypeStruct((rows, lane), x.dtype),
        grid_spec=pltpu.PrefetchScalarGridSpec(
            num_scalar_prefetch=0,
            grid=(grid_steps,),
            # Raw HBM refs: the kernel DMAs HBM->HBM directly, zero VMEM.
            in_specs=[pl.BlockSpec(memory_space=pl.ANY)],
            out_specs=pl.BlockSpec(memory_space=pl.ANY),
            scratch_shapes=[pltpu.SemaphoreType.DMA((chunks_per_step + 1,))],
        ),
        compiler_params=pltpu.CompilerParams(
            dimension_semantics=("parallel",),
        ),
        cost_estimate=pl.CostEstimate(
            flops=0, transcendentals=0, bytes_accessed=2 * n * itemsize
        ),
    )(x2d)
    return out2d.reshape(orig_shape)


def base_timestep_network_forward(x: jax.Array, *, materialize_copy: bool = False) -> jax.Array:
    """Forward pass of BaseTimeStepNetwork.

    The base class has an empty nn.ModuleList, so forward() is the identity.
    The optimal lowering is no data movement at all (`return x`).  Set
    `materialize_copy=True` to force a fresh output buffer via the Pallas
    HBM->HBM DMA kernel (kept as the skeleton a subclass would fill with
    real layer compute).
    """
    if not materialize_copy:
        return x
    return _identity_copy_pallas(x)


if __name__ == "__main__":
    key = jax.random.PRNGKey(0)
    k1, k2, k3, k4 = jax.random.split(key, 4)

    # 1) Default base-class path: identity bypass, zero data movement.
    x = jax.random.normal(k1, (2, 4, 16, 16), dtype=jnp.float32)  # NCHW SNN frame
    y = jax.block_until_ready(base_timestep_network_forward(x))
    assert y.shape == x.shape and y.dtype == x.dtype
    assert bool(jnp.array_equal(y, x))

    # 2) Forced materialized copy on the small tensor: single full-ref DMA.
    y_copy = jax.block_until_ready(base_timestep_network_forward(x, materialize_copy=True))
    assert y_copy.shape == x.shape and y_copy.dtype == x.dtype
    assert bool(jnp.array_equal(y_copy, x))

    # 3) (T, B, hidden) time-step activation > 1 MiB: 2-step parallel grid,
    #    2 outstanding chunk DMAs per step, plus a remainder-tail DMA
    #    (rows = 525 -> 4 chunks of 131 rows + 1-row tail).
    x_t = jax.random.normal(k2, (21, 25, 1024), dtype=jnp.float32)
    y_t = jax.block_until_ready(base_timestep_network_forward(x_t, materialize_copy=True))
    assert bool(jnp.array_equal(y_t, x_t))

    # 4) bf16 activations: sub-MiB, single DMA; dtype is preserved.
    x_bf16 = jax.random.normal(k3, (4, 16, 32, 128), dtype=jnp.bfloat16)
    y_bf16 = jax.block_until_ready(base_timestep_network_forward(x_bf16, materialize_copy=True))
    assert y_bf16.dtype == x_bf16.dtype and bool(jnp.array_equal(y_bf16, x_bf16))

    # 5) Ragged element count (n % 128 != 0): (1, n) view, whole-ref DMA,
    #    zero VMEM — no robustness cliff regardless of size.
    x_rag = jax.random.normal(k4, (3, 5, 7), dtype=jnp.float32)
    y_rag = jax.block_until_ready(base_timestep_network_forward(x_rag, materialize_copy=True))
    assert bool(jnp.array_equal(y_rag, x_rag))

    print("KERNEL_OK")
</pallas_src>

<mosaic_0001>
module attributes {stable_mosaic.version = 11 : i64} {
  func.func @kernel(%arg0: i32, %arg1: memref<8x256xf32, #tpu.memory_space<any>>, %arg2: memref<8x256xf32, #tpu.memory_space<any>>, %arg3: memref<2x!tpu.dma_semaphore, #tpu.memory_space<semaphore_mem>>) attributes {dimension_semantics = [#tpu.dimension_semantics<parallel>], iteration_bounds = array<i64: 1>, scalar_prefetch = 0 : i64, scratch_operands = 1 : i64, tpu.core_type = #tpu.core_type<tc>, window_params = [{}, {}]} {
    %c1_i32 = arith.constant 1 : i32
    %0 = arith.muli %arg0, %c1_i32 : i32
    %c0_i32 = arith.constant 0 : i32
    %1 = arith.addi %0, %c0_i32 : i32
    %c8_i32 = arith.constant 8 : i32
    %2 = arith.muli %1, %c8_i32 : i32
    %c0_i32_0 = arith.constant 0 : i32
    %c0_i32_1 = arith.constant 0 : i32
    %3 = tpu.memref_slice %arg1[%2, %c0_i32_1] : memref<8x256xf32, #tpu.memory_space<any>> -> memref<8x256xf32, #tpu.memory_space<any>>
    %c0_i32_2 = arith.constant 0 : i32
    %4 = tpu.memref_slice %arg2[%2, %c0_i32_2] : memref<8x256xf32, #tpu.memory_space<any>> -> memref<8x256xf32, #tpu.memory_space<any>>
    %5 = tpu.memref_slice %arg3[%c0_i32_0] : memref<2x!tpu.dma_semaphore, #tpu.memory_space<semaphore_mem>> -> memref<1x!tpu.dma_semaphore, #tpu.memory_space<semaphore_mem>>
    %6 = tpu.memref_squeeze %5 : memref<1x!tpu.dma_semaphore, #tpu.memory_space<semaphore_mem>> -> memref<!tpu.dma_semaphore, #tpu.memory_space<semaphore_mem>>
    tpu.enqueue_dma source(%3 : memref<8x256xf32, #tpu.memory_space<any>>) target(%4 : memref<8x256xf32, #tpu.memory_space<any>>) target_semaphore(%6 : memref<!tpu.dma_semaphore, #tpu.memory_space<semaphore_mem>>)
    %c0_i32_3 = arith.constant 0 : i32
    %c0_i32_4 = arith.constant 0 : i32
    %7 = tpu.memref_slice %arg1[%2, %c0_i32_4] : memref<8x256xf32, #tpu.memory_space<any>> -> memref<8x256xf32, #tpu.memory_space<any>>
    %c0_i32_5 = arith.constant 0 : i32
    %8 = tpu.memref_slice %arg2[%2, %c0_i32_5] : memref<8x256xf32, #tpu.memory_space<any>> -> memref<8x256xf32, #tpu.memory_space<any>>
    %9 = tpu.memref_slice %arg3[%c0_i32_3] : memref<2x!tpu.dma_semaphore, #tpu.memory_space<semaphore_mem>> -> memref<1x!tpu.dma_semaphore, #tpu.memory_space<semaphore_mem>>
    %10 = tpu.memref_squeeze %9 : memref<1x!tpu.dma_semaphore, #tpu.memory_space<semaphore_mem>> -> memref<!tpu.dma_semaphore, #tpu.memory_space<semaphore_mem>>
    tpu.wait_dma2 semaphore(%10 : memref<!tpu.dma_semaphore, #tpu.memory_space<semaphore_mem>>) src(%7 : memref<8x256xf32, #tpu.memory_space<any>>) dst(%8 : memref<8x256xf32, #tpu.memory_space<any>>)
    return
  }
}

</mosaic_0001>

<llo_original>
// kernel: tpu_custom_call.1
$region0: #{tpu_custom_call.1}
  #allocation0 [shape = 'u32[]', space=smem, size = 0x4, offset = 0x4, fixed_abs, tag = 'smem constant byte address 0x4 - core index']
  #allocation1 [shape = 'u32[144,128]{1,0:T(1,128)}', space=vmem, size = 0x12000, scoped, tag = 'internal scratch']
  #allocation2 [shape = 's32[2]{0}', space=sflag, size = 0x8, scoped, tag = 'scratch operand']
  #allocation3 [shape = 's32[]', space=sflag, size = 0x4, offset = 0, fixed_abs, tag = 'sflag constant byte address 0x0 - dummy sync flag']
  #allocation4 [shape = 'u32[0]{0}', space=smem, size = 0, offset = 0, fixed_abs, tag = 'smem constant byte address 0x0 - null']
  %s0 = inlined_call_operand.hbm [shape: f32[8,256], index: 0, kind: input, shape index: {}]
  %s1 = inlined_call_operand.hbm [shape: f32[8,256], index: 1, kind: output, shape index: {}]
  %s2 = sld [smem:[#allocation0]]
  $region2: #{tpu_custom_call.1} parent=0
    _
  %s4 = ssub.s32 1, %s2
  %s5 = scalar_select 0, %s4, %s2
  %s6 = smul.u32 0, 8
  %s7 = sshra.s32 %s6, 3
  %s8 = sand.u32 %s6, 7
  %s9 = smul.u32 %s7, 2
  %s10 = smul.addr %s9, 128
  %s11 = scalar_lea.hbm %s0, %s10
  %s12 = smul.addr %s9, 128
  %s13 = scalar_lea.hbm %s1, %s12
  %s15 = sshll.u32 1, 14
  %s16 = sxor.u32 4294967295, %s15
  %20 = dma.general %s11, 256, %s13, [#allocation2], 131072, [#allocation4], 0, 0
  %s21 = smul.u32 8, 1
  %s22 = smul.u32 %s21, 2
  %s23 = sshll.u32 %s22, 4
  %24 = dma.done [#allocation2], %s23
  %25 = vsyncmov [#allocation2]
  %s26 = vpop.sfrf %25
  %p27 = scmp.eq.s32.totalorder %s26, 0
  %p28 = pneg %p27
  %30 = shalt.err (%p28)
  %s31 = scalar_lea.sflag [#allocation2], 1
  %32 = vsyncmov %s31
  %s33 = vpop.sfrf %32
  %p34 = scmp.eq.s32.totalorder %s33, 0
  %p35 = pneg %p34
  %37 = shalt.err (%p35)

</llo_original>
